<compile_context>
chip_gen: v5e
topology: v5e:2x2
jax: 0.10.0
libtpu: 0.0.40
codegen_flags: <defaults>
</compile_context>

<pallas_src>
import functools
import math

import jax
import jax.numpy as jnp
from jax.experimental import pallas as pl
from jax.experimental.pallas import tpu as pltpu

_LANE = 128
_SUBLANE = 8


def _round_up(x, m):
    return ((x + m - 1) // m) * m


def _pad2d(a, rows, cols):
    return jnp.pad(a, ((0, rows - a.shape[0]), (0, cols - a.shape[1])))


def _make_mlp_kernel(num_hidden_matmuls: int):
    """Fused MLP kernel over one lane-padded batch tile.

    num_hidden_matmuls = n_hidden_layers - 1 (number of square hidden Linears).
    """
    has_hidden = num_hidden_matmuls > 0

    def kernel(*refs):
        if has_hidden:
            (x_ref, w_in_ref, b_in_ref, w_h_ref, b_h_ref,
             w_out_ref, b_out_ref, o_ref) = refs
        else:
            x_ref, w_in_ref, b_in_ref, w_out_ref, b_out_ref, o_ref = refs

        wdt = w_in_ref.dtype
        # Input layer + tanh (f32 accumulation; tanh kept in f32 for v5e).
        h = jnp.tanh(
            jnp.dot(x_ref[...].astype(wdt), w_in_ref[...],
                    preferred_element_type=jnp.float32)
            + b_in_ref[...].astype(jnp.float32))
        # Hidden layers (statically unrolled) + tanh.
        for k in range(num_hidden_matmuls):
            h = jnp.tanh(
                jnp.dot(h.astype(wdt), w_h_ref[k],
                        preferred_element_type=jnp.float32)
                + b_h_ref[k].astype(jnp.float32))
        # Output layer (no activation); lane-dense (128-padded) store.
        o_ref[...] = (
            jnp.dot(h.astype(wdt), w_out_ref[...],
                    preferred_element_type=jnp.float32)
            + b_out_ref[...].astype(jnp.float32)
        ).astype(o_ref.dtype)

    return kernel


def neural_net_forward(x, params, n_hidden_layers, *, batch_tile=256,
                       weight_dtype=None):
    """Runs the full MLP forward pass in one Pallas call with a batch-tiled grid."""
    w_in, b_in, w_h, b_h, w_out, b_out = params
    B, in_dim = x.shape
    neurons = w_in.shape[1]
    out_dim = w_out.shape[1]
    n_hidden_matmuls = n_hidden_layers - 1

    # Optional bf16 weights for v6e/v7x MXU throughput (f32 accumulation kept).
    if weight_dtype is not None:
        cast = lambda a: a.astype(weight_dtype)
        w_in, b_in, w_h, b_h, w_out, b_out = map(
            cast, (w_in, b_in, w_h, b_h, w_out, b_out))
    w_itemsize = jnp.dtype(w_in.dtype).itemsize

    # ---- Lane/sublane padding (exact: zeros stay zeros through tanh). ----
    in_p = _round_up(in_dim, _LANE)
    n_p = _round_up(neurons, _LANE)
    out_p = _round_up(out_dim, _LANE)

    tb = _round_up(min(batch_tile, _round_up(B, _SUBLANE)), _SUBLANE)
    b_p = _round_up(B, tb)

    x_p = _pad2d(x, b_p, in_p)
    w_in_p = _pad2d(w_in, in_p, n_p)
    b_in_p = _pad2d(b_in, 1, n_p)
    w_out_p = _pad2d(w_out, n_p, out_p)
    b_out_p = _pad2d(b_out, 1, out_p)

    const2 = lambda shape: pl.BlockSpec(shape, lambda i: (0, 0))
    args = [x_p, w_in_p, b_in_p]
    in_specs = [
        pl.BlockSpec((tb, in_p), lambda i: (i, 0)),   # batch-tiled input
        const2((in_p, n_p)),                          # VMEM-resident weights
        const2((1, n_p)),
    ]
    if n_hidden_matmuls > 0:
        w_h_p = jnp.pad(w_h, ((0, 0), (0, n_p - neurons), (0, n_p - neurons)))
        b_h_p = jnp.pad(b_h, ((0, 0), (0, 0), (0, n_p - neurons)))
        args += [w_h_p, b_h_p]
        in_specs += [
            pl.BlockSpec((n_hidden_matmuls, n_p, n_p), lambda i: (0, 0, 0)),
            pl.BlockSpec((n_hidden_matmuls, 1, n_p), lambda i: (0, 0, 0)),
        ]
    args += [w_out_p, b_out_p]
    in_specs += [const2((n_p, out_p)), const2((1, out_p))]

    # ---- VMEM budget: weights (x2 for buffering) + double-buffered x/out tiles
    #      + f32 activation intermediates, with headroom; capped at 64 MiB (v7x).
    weight_bytes = (in_p * n_p + n_p
                    + n_hidden_matmuls * (n_p * n_p + n_p)
                    + n_p * out_p + out_p) * w_itemsize
    est = (2 * weight_bytes
           + 2 * tb * in_p * 4
           + 2 * tb * out_p * 4
           + 4 * tb * n_p * 4)
    vmem_limit = int(min(max(est + (4 << 20), 32 << 20), 64 << 20))

    out_padded = pl.pallas_call(
        _make_mlp_kernel(n_hidden_matmuls),
        out_shape=jax.ShapeDtypeStruct((b_p, out_p), x.dtype),
        grid=(b_p // tb,),
        in_specs=in_specs,
        out_specs=pl.BlockSpec((tb, out_p), lambda i: (i, 0)),
        compiler_params=pltpu.CompilerParams(
            dimension_semantics=("parallel",),
            vmem_limit_bytes=vmem_limit),
    )(*args)

    # Strip batch and lane padding in the wrapper (layout plumbing, not compute).
    return out_padded[:B, :out_dim]


def init_params(key, input_dimension, output_dimension, n_hidden_layers,
                neurons, dtype=jnp.float32):
    """Xavier-uniform init with tanh gain (matches nn.init semantics),
    biases zero.  Weights stored as (in_features, out_features)."""
    gain = 5.0 / 3.0  # nn.init.calculate_gain('tanh')

    def xavier(key, fan_in, fan_out, shape):
        bound = gain * math.sqrt(6.0 / (fan_in + fan_out))
        return jax.random.uniform(key, shape, dtype=dtype,
                                  minval=-bound, maxval=bound)

    keys = jax.random.split(key, n_hidden_layers + 1)

    w_in = xavier(keys[0], input_dimension, neurons,
                  (input_dimension, neurons))
    b_in = jnp.zeros((1, neurons), dtype=dtype)

    n_hid = n_hidden_layers - 1
    if n_hid > 0:
        w_h = jnp.stack([xavier(keys[1 + k], neurons, neurons,
                                (neurons, neurons)) for k in range(n_hid)])
        b_h = jnp.stack([jnp.zeros((1, neurons), dtype=dtype)
                         for _ in range(n_hid)])
    else:  # no dummy hidden weights are allocated or DMA'd
        w_h = jnp.zeros((0, neurons, neurons), dtype=dtype)
        b_h = jnp.zeros((0, 1, neurons), dtype=dtype)

    w_out = xavier(keys[-1], neurons, output_dimension,
                   (neurons, output_dimension))
    b_out = jnp.zeros((1, output_dimension), dtype=dtype)

    return (w_in, b_in, w_h, b_h, w_out, b_out)


def reference_forward(x, params, n_hidden_layers):
    """Plain-JAX reference of the same forward pass (for validation)."""
    w_in, b_in, w_h, b_h, w_out, b_out = params
    h = jnp.tanh(x @ w_in + b_in)
    for k in range(n_hidden_layers - 1):
        h = jnp.tanh(h @ w_h[k] + b_h[k])
    return h @ w_out + b_out


if __name__ == "__main__":
    key = jax.random.PRNGKey(0)

    # --- Test 1: original toy config (B=8 -> single batch tile). ---
    input_dimension, output_dimension = 2, 1
    n_hidden_layers, neurons, batch = 4, 32, 8

    k_param, k_x, k_param2, k_x2 = jax.random.split(key, 4)
    params = init_params(k_param, input_dimension, output_dimension,
                         n_hidden_layers, neurons)
    x = jax.random.normal(k_x, (batch, input_dimension), dtype=jnp.float32)

    fwd = jax.jit(functools.partial(neural_net_forward,
                                    n_hidden_layers=n_hidden_layers))
    y = fwd(x, params)
    jax.block_until_ready(y)
    y_ref = reference_forward(x, params, n_hidden_layers)
    assert y.shape == (batch, output_dimension)
    assert jnp.allclose(y, y_ref, atol=1e-5, rtol=1e-5)

    # --- Test 2: larger, non-aligned batch -> multi-tile parallel grid. ---
    n_hidden_layers2, neurons2, batch2 = 3, 32, 300
    params2 = init_params(k_param2, input_dimension, output_dimension,
                          n_hidden_layers2, neurons2)
    x2 = jax.random.normal(k_x2, (batch2, input_dimension), dtype=jnp.float32)
    fwd2 = jax.jit(functools.partial(neural_net_forward,
                                     n_hidden_layers=n_hidden_layers2,
                                     batch_tile=128))
    y2 = fwd2(x2, params2)
    jax.block_until_ready(y2)
    y2_ref = reference_forward(x2, params2, n_hidden_layers2)
    assert y2.shape == (batch2, output_dimension)
    assert jnp.allclose(y2, y2_ref, atol=1e-5, rtol=1e-5)

    # TODO(synk): `regularization()` (weight-norm penalty) is a training-time
    # scalar loss, not part of the forward pass; left to plain JAX if needed.
    print("KERNEL_OK")
</pallas_src>

<mosaic_0001>
module attributes {stable_mosaic.version = 11 : i64} {
  func.func @kernel(%arg0: i32, %arg1: memref<8x128xf32, #tpu.memory_space<vmem>>, %arg2: memref<128x128xf32, #tpu.memory_space<vmem>>, %arg3: memref<1x128xf32, #tpu.memory_space<vmem>>, %arg4: memref<3x128x128xf32, #tpu.memory_space<vmem>>, %arg5: memref<3x1x128xf32, #tpu.memory_space<vmem>>, %arg6: memref<128x128xf32, #tpu.memory_space<vmem>>, %arg7: memref<1x128xf32, #tpu.memory_space<vmem>>, %arg8: memref<8x128xf32, #tpu.memory_space<vmem>>) attributes {dimension_semantics = [#tpu.dimension_semantics<parallel>], iteration_bounds = array<i64: 1>, scalar_prefetch = 0 : i64, scratch_operands = 0 : i64, tpu.core_type = #tpu.core_type<tc>, window_params = [{transform_indices = @transform_0, window_bounds = array<i64: 8, 128>}, {pipeline_mode = #tpu.pipeline_mode<synchronous>, transform_indices = @transform_1, window_bounds = array<i64: 128, 128>}, {pipeline_mode = #tpu.pipeline_mode<synchronous>, transform_indices = @transform_2, window_bounds = array<i64: 1, 128>}, {pipeline_mode = #tpu.pipeline_mode<synchronous>, transform_indices = @transform_3, window_bounds = array<i64: 3, 128, 128>}, {pipeline_mode = #tpu.pipeline_mode<synchronous>, transform_indices = @transform_4, window_bounds = array<i64: 3, 1, 128>}, {pipeline_mode = #tpu.pipeline_mode<synchronous>, transform_indices = @transform_5, window_bounds = array<i64: 128, 128>}, {pipeline_mode = #tpu.pipeline_mode<synchronous>, transform_indices = @transform_6, window_bounds = array<i64: 1, 128>}, {transform_indices = @transform_7, window_bounds = array<i64: 8, 128>}]} {
    %c0 = arith.constant 0 : index
    %c0_0 = arith.constant 0 : index
    %0 = vector.load %arg1[%c0, %c0_0] : memref<8x128xf32, #tpu.memory_space<vmem>>, vector<8x128xf32>
    %c0_1 = arith.constant 0 : index
    %c0_2 = arith.constant 0 : index
    %1 = vector.load %arg2[%c0_1, %c0_2] : memref<128x128xf32, #tpu.memory_space<vmem>>, vector<128x128xf32>
    %cst = arith.constant dense<0.000000e+00> : vector<8x128xf32>
    %2 = tpu.matmul %0, %1, %cst {dimension_numbers = #tpu.dot_dimension_numbers<[1], [0], [0], [1], [0, 0, 1, 1], [], []>} : vector<8x128xf32>, vector<128x128xf32>, vector<8x128xf32> -> vector<8x128xf32>
    %c0_3 = arith.constant 0 : index
    %c0_4 = arith.constant 0 : index
    %3 = vector.load %arg3[%c0_3, %c0_4] : memref<1x128xf32, #tpu.memory_space<vmem>>, vector<1x128xf32>
    %4 = vector.broadcast %3 : vector<1x128xf32> to vector<8x128xf32>
    %5 = arith.addf %2, %4 : vector<8x128xf32>
    %6 = math.tanh %5 : vector<8x128xf32>
    %c0_5 = arith.constant 0 : index
    %c0_6 = arith.constant 0 : index
    %c0_7 = arith.constant 0 : index
    %7 = vector.load %arg4[%c0_5, %c0_6, %c0_7] : memref<3x128x128xf32, #tpu.memory_space<vmem>>, vector<1x128x128xf32>
    %8 = vector.shape_cast %7 : vector<1x128x128xf32> to vector<128x128xf32>
    %cst_8 = arith.constant dense<0.000000e+00> : vector<8x128xf32>
    %9 = tpu.matmul %6, %8, %cst_8 {dimension_numbers = #tpu.dot_dimension_numbers<[1], [0], [0], [1], [0, 0, 1, 1], [], []>} : vector<8x128xf32>, vector<128x128xf32>, vector<8x128xf32> -> vector<8x128xf32>
    %c0_9 = arith.constant 0 : index
    %c0_10 = arith.constant 0 : index
    %c0_11 = arith.constant 0 : index
    %10 = vector.load %arg5[%c0_9, %c0_10, %c0_11] : memref<3x1x128xf32, #tpu.memory_space<vmem>>, vector<1x1x128xf32>
    %11 = vector.shape_cast %10 : vector<1x1x128xf32> to vector<1x128xf32>
    %12 = vector.broadcast %11 : vector<1x128xf32> to vector<8x128xf32>
    %13 = arith.addf %9, %12 : vector<8x128xf32>
    %14 = math.tanh %13 : vector<8x128xf32>
    %c1 = arith.constant 1 : index
    %c0_12 = arith.constant 0 : index
    %c0_13 = arith.constant 0 : index
    %15 = vector.load %arg4[%c1, %c0_12, %c0_13] : memref<3x128x128xf32, #tpu.memory_space<vmem>>, vector<1x128x128xf32>
    %16 = vector.shape_cast %15 : vector<1x128x128xf32> to vector<128x128xf32>
    %cst_14 = arith.constant dense<0.000000e+00> : vector<8x128xf32>
    %17 = tpu.matmul %14, %16, %cst_14 {dimension_numbers = #tpu.dot_dimension_numbers<[1], [0], [0], [1], [0, 0, 1, 1], [], []>} : vector<8x128xf32>, vector<128x128xf32>, vector<8x128xf32> -> vector<8x128xf32>
    %c1_15 = arith.constant 1 : index
    %c0_16 = arith.constant 0 : index
    %c0_17 = arith.constant 0 : index
    %18 = vector.load %arg5[%c1_15, %c0_16, %c0_17] : memref<3x1x128xf32, #tpu.memory_space<vmem>>, vector<1x1x128xf32>
    %19 = vector.shape_cast %18 : vector<1x1x128xf32> to vector<1x128xf32>
    %20 = vector.broadcast %19 : vector<1x128xf32> to vector<8x128xf32>
    %21 = arith.addf %17, %20 : vector<8x128xf32>
    %22 = math.tanh %21 : vector<8x128xf32>
    %c2 = arith.constant 2 : index
    %c0_18 = arith.constant 0 : index
    %c0_19 = arith.constant 0 : index
    %23 = vector.load %arg4[%c2, %c0_18, %c0_19] : memref<3x128x128xf32, #tpu.memory_space<vmem>>, vector<1x128x128xf32>
    %24 = vector.shape_cast %23 : vector<1x128x128xf32> to vector<128x128xf32>
    %cst_20 = arith.constant dense<0.000000e+00> : vector<8x128xf32>
    %25 = tpu.matmul %22, %24, %cst_20 {dimension_numbers = #tpu.dot_dimension_numbers<[1], [0], [0], [1], [0, 0, 1, 1], [], []>} : vector<8x128xf32>, vector<128x128xf32>, vector<8x128xf32> -> vector<8x128xf32>
    %c2_21 = arith.constant 2 : index
    %c0_22 = arith.constant 0 : index
    %c0_23 = arith.constant 0 : index
    %26 = vector.load %arg5[%c2_21, %c0_22, %c0_23] : memref<3x1x128xf32, #tpu.memory_space<vmem>>, vector<1x1x128xf32>
    %27 = vector.shape_cast %26 : vector<1x1x128xf32> to vector<1x128xf32>
    %28 = vector.broadcast %27 : vector<1x128xf32> to vector<8x128xf32>
    %29 = arith.addf %25, %28 : vector<8x128xf32>
    %30 = math.tanh %29 : vector<8x128xf32>
    %c0_24 = arith.constant 0 : index
    %c0_25 = arith.constant 0 : index
    %31 = vector.load %arg6[%c0_24, %c0_25] : memref<128x128xf32, #tpu.memory_space<vmem>>, vector<128x128xf32>
    %cst_26 = arith.constant dense<0.000000e+00> : vector<8x128xf32>
    %32 = tpu.matmul %30, %31, %cst_26 {dimension_numbers = #tpu.dot_dimension_numbers<[1], [0], [0], [1], [0, 0, 1, 1], [], []>} : vector<8x128xf32>, vector<128x128xf32>, vector<8x128xf32> -> vector<8x128xf32>
    %c0_27 = arith.constant 0 : index
    %c0_28 = arith.constant 0 : index
    %33 = vector.load %arg7[%c0_27, %c0_28] : memref<1x128xf32, #tpu.memory_space<vmem>>, vector<1x128xf32>
    %34 = vector.broadcast %33 : vector<1x128xf32> to vector<8x128xf32>
    %35 = arith.addf %32, %34 : vector<8x128xf32>
    %c0_29 = arith.constant 0 : index
    %c0_30 = arith.constant 0 : index
    %36 = vector.load %arg8[%c0_29, %c0_30] : memref<8x128xf32, #tpu.memory_space<vmem>>, vector<8x128xf32>
    tpu.vector_store %arg8[%c0_29, %c0_30], %35 {strides = array<i32>} : memref<8x128xf32, #tpu.memory_space<vmem>>, vector<8x128xf32>,
    return
  }
  func.func @transform_0(%arg0: i32) -> (i32, i32) {
    %c0_i32 = arith.constant 0 : i32
    %c0_i32_0 = arith.constant 0 : i32
    return %arg0, %c0_i32 : i32, i32
  }
  func.func @transform_1(%arg0: i32) -> (i32, i32) {
    %c0_i32 = arith.constant 0 : i32
    %c0_i32_0 = arith.constant 0 : i32
    %c0_i32_1 = arith.constant 0 : i32
    return %c0_i32, %c0_i32_0 : i32, i32
  }
  func.func @transform_2(%arg0: i32) -> (i32, i32) {
    %c0_i32 = arith.constant 0 : i32
    %c0_i32_0 = arith.constant 0 : i32
    %c0_i32_1 = arith.constant 0 : i32
    return %c0_i32, %c0_i32_0 : i32, i32
  }
  func.func @transform_3(%arg0: i32) -> (i32, i32, i32) {
    %c0_i32 = arith.constant 0 : i32
    %c0_i32_0 = arith.constant 0 : i32
    %c0_i32_1 = arith.constant 0 : i32
    %c0_i32_2 = arith.constant 0 : i32
    return %c0_i32, %c0_i32_0, %c0_i32_1 : i32, i32, i32
  }
  func.func @transform_4(%arg0: i32) -> (i32, i32, i32) {
    %c0_i32 = arith.constant 0 : i32
    %c0_i32_0 = arith.constant 0 : i32
    %c0_i32_1 = arith.constant 0 : i32
    %c0_i32_2 = arith.constant 0 : i32
    return %c0_i32, %c0_i32_0, %c0_i32_1 : i32, i32, i32
  }
  func.func @transform_5(%arg0: i32) -> (i32, i32) {
    %c0_i32 = arith.constant 0 : i32
    %c0_i32_0 = arith.constant 0 : i32
    %c0_i32_1 = arith.constant 0 : i32
    return %c0_i32, %c0_i32_0 : i32, i32
  }
  func.func @transform_6(%arg0: i32) -> (i32, i32) {
    %c0_i32 = arith.constant 0 : i32
    %c0_i32_0 = arith.constant 0 : i32
    %c0_i32_1 = arith.constant 0 : i32
    return %c0_i32, %c0_i32_0 : i32, i32
  }
  func.func @transform_7(%arg0: i32) -> (i32, i32) {
    %c0_i32 = arith.constant 0 : i32
    %c0_i32_0 = arith.constant 0 : i32
    return %arg0, %c0_i32 : i32, i32
  }
}

</mosaic_0001>

<llo_original>
// kernel: neural_net_forward.1
$region0: #{neural_net_forward.1}
  #allocation0 [shape = 'u32[]', space=smem, size = 0x4, offset = 0x4, fixed_abs, tag = 'smem constant byte address 0x4 - core index']
  #allocation1 [shape = 'u32[72,128]{1,0:T(1,128)}', space=vmem, size = 0x9000, scoped, tag = 'internal scratch']
  %s0 = inlined_call_operand.vmem [shape: f32[8,128], index: 0, kind: input, shape index: {}]
  %s1 = inlined_call_operand.vmem [shape: f32[128,128], index: 1, kind: input, shape index: {}]
  %s2 = inlined_call_operand.vmem [shape: f32[1,128], index: 2, kind: input, shape index: {}]
  %s3 = inlined_call_operand.vmem [shape: f32[3,128,128], index: 3, kind: input, shape index: {}]
  %s4 = inlined_call_operand.vmem [shape: f32[3,1,128], index: 4, kind: input, shape index: {}]
  %s5 = inlined_call_operand.vmem [shape: f32[128,128], index: 5, kind: input, shape index: {}]
  %s6 = inlined_call_operand.vmem [shape: f32[1,128], index: 6, kind: input, shape index: {}]
  %s7 = inlined_call_operand.vmem [shape: f32[8,128], index: 7, kind: output, shape index: {}]
  %s8 = sld [smem:[#allocation0]]
  $region38: #{neural_net_forward.1} parent=0
    _
  %s10 = ssub.s32 1, %s8
  %s11 = scalar_select 0, %s10, %s8
  // Predicated region
  $region2: #{neural_net_forward.1} parent=0 // pred_check
    _
  $region3: #{neural_net_forward.1} parent=0 // pred_check_branch
    %13 = sbr.rel (0) target = $region5
  $region4: #{neural_net_forward.1} parent=0 // pred_region
    _
  $region5: #{neural_net_forward.1} parent=0 // pred_fallthru
    _
  // Predicated region
  $region6: #{neural_net_forward.1} parent=0 // pred_check
    _
  $region7: #{neural_net_forward.1} parent=0 // pred_check_branch
    %15 = sbr.rel (0) target = $region9
  $region8: #{neural_net_forward.1} parent=0 // pred_region
    _
  $region9: #{neural_net_forward.1} parent=0 // pred_fallthru
    _
  // Predicated region
  $region10: #{neural_net_forward.1} parent=0 // pred_check
    _
  $region11: #{neural_net_forward.1} parent=0 // pred_check_branch
    %17 = sbr.rel (0) target = $region13
  $region12: #{neural_net_forward.1} parent=0 // pred_region
    _
  $region13: #{neural_net_forward.1} parent=0 // pred_fallthru
    _
  // Predicated region
  $region14: #{neural_net_forward.1} parent=0 // pred_check
    _
  $region15: #{neural_net_forward.1} parent=0 // pred_check_branch
    %19 = sbr.rel (0) target = $region17
  $region16: #{neural_net_forward.1} parent=0 // pred_region
    _
  $region17: #{neural_net_forward.1} parent=0 // pred_fallthru
    _
  // Predicated region
  $region18: #{neural_net_forward.1} parent=0 // pred_check
    _
  $region19: #{neural_net_forward.1} parent=0 // pred_check_branch
    %21 = sbr.rel (0) target = $region21
  $region20: #{neural_net_forward.1} parent=0 // pred_region
    _
  $region21: #{neural_net_forward.1} parent=0 // pred_fallthru
    _
  // Predicated region
  $region22: #{neural_net_forward.1} parent=0 // pred_check
    _
  $region23: #{neural_net_forward.1} parent=0 // pred_check_branch
    %23 = sbr.rel (0) target = $region25
  $region24: #{neural_net_forward.1} parent=0 // pred_region
    _
  $region25: #{neural_net_forward.1} parent=0 // pred_fallthru
    _
  // Predicated region
  $region26: #{neural_net_forward.1} parent=0 // pred_check
    _
  $region27: #{neural_net_forward.1} parent=0 // pred_check_branch
    %25 = sbr.rel (0) target = $region29
  $region28: #{neural_net_forward.1} parent=0 // pred_region
    _
  $region29: #{neural_net_forward.1} parent=0 // pred_fallthru
    _
  %v26 = vld [vmem:[%s0] sm:$0xff]
  %v27 = vld [vmem:[%s1] sm:$0xff]
  %v28 = vld [vmem:[%s1 + $0x8] sm:$0xff]
  %v29 = vld [vmem:[%s1 + $0x10] sm:$0xff]
  %v30 = vld [vmem:[%s1 + $0x18] sm:$0xff]
  %v31 = vld [vmem:[%s1 + $0x20] sm:$0xff]
  %v32 = vld [vmem:[%s1 + $0x28] sm:$0xff]
  %v33 = vld [vmem:[%s1 + $0x30] sm:$0xff]
  %v34 = vld [vmem:[%s1 + $0x38] sm:$0xff]
  %v35 = vld [vmem:[%s1 + $0x40] sm:$0xff]
  %v36 = vld [vmem:[%s1 + $0x48] sm:$0xff]
  %v37 = vld [vmem:[%s1 + $0x50] sm:$0xff]
  %v38 = vld [vmem:[%s1 + $0x58] sm:$0xff]
  %v39 = vld [vmem:[%s1 + $0x60] sm:$0xff]
  %v40 = vld [vmem:[%s1 + $0x68] sm:$0xff]
  %v41 = vld [vmem:[%s1 + $0x70] sm:$0xff]
  %v42 = vld [vmem:[%s1 + $0x78] sm:$0xff]
  %v43 = vld [vmem:[%s2] sm:$0x1]
  %v45 = vperm.slane %v43, 0
  %47 = vmatpush.msra.mxu0 %v42
  %48 = vmatpush.msra.mxu0 %v41
  %49 = vmatpush.msra.mxu0 %v40
  %50 = vmatpush.msra.mxu0 %v39
  %51 = vmatpush.msra.mxu0 %v38
  %52 = vmatpush.msra.mxu0 %v37
  %53 = vmatpush.msra.mxu0 %v36
  %54 = vmatpush.msra.mxu0 %v35
  %55 = vmatpush.msra.mxu0 %v34
  %56 = vmatpush.msra.mxu0 %v33
  %57 = vmatpush.msra.mxu0 %v32
  %58 = vmatpush.msra.mxu0 %v31
  %59 = vmatpush.msra.mxu0 %v30
  %60 = vmatpush.msra.mxu0 %v29
  %61 = vmatpush.msra.mxu0 %v28
  %62 = vmatpush.msra.mxu0 %v27
  %63 = vmatmul.f32.gmra.mxu0 %v26
  %v64 = vpop.f32.mrf.mxu0
  %v65 = vadd.f32 %v45, %v64
  %66 = vdwg.mxu0
  %v67 = vtanh.pop %v65
  %v68 = vld [vmem:[%s3] sm:$0xff]
  %v69 = vld [vmem:[%s3 + $0x8] sm:$0xff]
  %v70 = vld [vmem:[%s3 + $0x10] sm:$0xff]
  %v71 = vld [vmem:[%s3 + $0x18] sm:$0xff]
  %v72 = vld [vmem:[%s3 + $0x20] sm:$0xff]
  %v73 = vld [vmem:[%s3 + $0x28] sm:$0xff]
  %v74 = vld [vmem:[%s3 + $0x30] sm:$0xff]
  %v75 = vld [vmem:[%s3 + $0x38] sm:$0xff]
  %v76 = vld [vmem:[%s3 + $0x40] sm:$0xff]
  %v77 = vld [vmem:[%s3 + $0x48] sm:$0xff]
  %v78 = vld [vmem:[%s3 + $0x50] sm:$0xff]
  %v79 = vld [vmem:[%s3 + $0x58] sm:$0xff]
  %v80 = vld [vmem:[%s3 + $0x60] sm:$0xff]
  %v81 = vld [vmem:[%s3 + $0x68] sm:$0xff]
  %v82 = vld [vmem:[%s3 + $0x70] sm:$0xff]
  %v83 = vld [vmem:[%s3 + $0x78] sm:$0xff]
  %v84 = vld [vmem:[%s4] sm:$0x1]
  %v86 = vperm.slane %v84, 0
  %88 = vmatpush.msra.mxu0 %v83
  %89 = vmatpush.msra.mxu0 %v82
  %90 = vmatpush.msra.mxu0 %v81
  %91 = vmatpush.msra.mxu0 %v80
  %92 = vmatpush.msra.mxu0 %v79
  %93 = vmatpush.msra.mxu0 %v78
  %94 = vmatpush.msra.mxu0 %v77
  %95 = vmatpush.msra.mxu0 %v76
  %96 = vmatpush.msra.mxu0 %v75
  %97 = vmatpush.msra.mxu0 %v74
  %98 = vmatpush.msra.mxu0 %v73
  %99 = vmatpush.msra.mxu0 %v72
  %100 = vmatpush.msra.mxu0 %v71
  %101 = vmatpush.msra.mxu0 %v70
  %102 = vmatpush.msra.mxu0 %v69
  %103 = vmatpush.msra.mxu0 %v68
  %104 = vmatmul.f32.gmra.mxu0 %v67
  %v105 = vpop.f32.mrf.mxu0
  %v106 = vadd.f32 %v86, %v105
  %107 = vdwg.mxu0
  %v108 = vtanh.pop %v106
  %s109 = scalar_lea.vmem %s3, 128
  %v110 = vld [vmem:[%s109] sm:$0xff]
  %v111 = vld [vmem:[%s109 + $0x8] sm:$0xff]
  %v112 = vld [vmem:[%s109 + $0x10] sm:$0xff]
  %v113 = vld [vmem:[%s109 + $0x18] sm:$0xff]
  %v114 = vld [vmem:[%s109 + $0x20] sm:$0xff]
  %v115 = vld [vmem:[%s109 + $0x28] sm:$0xff]
  %v116 = vld [vmem:[%s109 + $0x30] sm:$0xff]
  %v117 = vld [vmem:[%s109 + $0x38] sm:$0xff]
  %v118 = vld [vmem:[%s109 + $0x40] sm:$0xff]
  %v119 = vld [vmem:[%s109 + $0x48] sm:$0xff]
  %v120 = vld [vmem:[%s109 + $0x50] sm:$0xff]
  %v121 = vld [vmem:[%s109 + $0x58] sm:$0xff]
  %v122 = vld [vmem:[%s109 + $0x60] sm:$0xff]
  %v123 = vld [vmem:[%s109 + $0x68] sm:$0xff]
  %v124 = vld [vmem:[%s109 + $0x70] sm:$0xff]
  %v125 = vld [vmem:[%s109 + $0x78] sm:$0xff]
  %s126 = scalar_lea.vmem %s4, 1
  %v127 = vld [vmem:[%s126] sm:$0x1]
  %v129 = vperm.slane %v127, 0
  %131 = vmatpush.msra.mxu0 %v125
  %132 = vmatpush.msra.mxu0 %v124
  %133 = vmatpush.msra.mxu0 %v123
  %134 = vmatpush.msra.mxu0 %v122
  %135 = vmatpush.msra.mxu0 %v121
  %136 = vmatpush.msra.mxu0 %v120
  %137 = vmatpush.msra.mxu0 %v119
  %138 = vmatpush.msra.mxu0 %v118
  %139 = vmatpush.msra.mxu0 %v117
  %140 = vmatpush.msra.mxu0 %v116
  %141 = vmatpush.msra.mxu0 %v115
  %142 = vmatpush.msra.mxu0 %v114
  %143 = vmatpush.msra.mxu0 %v113
  %144 = vmatpush.msra.mxu0 %v112
  %145 = vmatpush.msra.mxu0 %v111
  %146 = vmatpush.msra.mxu0 %v110
  %147 = vmatmul.f32.gmra.mxu0 %v108
  %v148 = vpop.f32.mrf.mxu0
  %v149 = vadd.f32 %v129, %v148
  %150 = vdwg.mxu0
  %v151 = vtanh.pop %v149
  %s152 = scalar_lea.vmem %s3, 256
  %v153 = vld [vmem:[%s152] sm:$0xff]
  %v154 = vld [vmem:[%s152 + $0x8] sm:$0xff]
  %v155 = vld [vmem:[%s152 + $0x10] sm:$0xff]
  %v156 = vld [vmem:[%s152 + $0x18] sm:$0xff]
  %v157 = vld [vmem:[%s152 + $0x20] sm:$0xff]
  %v158 = vld [vmem:[%s152 + $0x28] sm:$0xff]
  %v159 = vld [vmem:[%s152 + $0x30] sm:$0xff]
  %v160 = vld [vmem:[%s152 + $0x38] sm:$0xff]
  %v161 = vld [vmem:[%s152 + $0x40] sm:$0xff]
  %v162 = vld [vmem:[%s152 + $0x48] sm:$0xff]
  %v163 = vld [vmem:[%s152 + $0x50] sm:$0xff]
  %v164 = vld [vmem:[%s152 + $0x58] sm:$0xff]
  %v165 = vld [vmem:[%s152 + $0x60] sm:$0xff]
  %v166 = vld [vmem:[%s152 + $0x68] sm:$0xff]
  %v167 = vld [vmem:[%s152 + $0x70] sm:$0xff]
  %v168 = vld [vmem:[%s152 + $0x78] sm:$0xff]
  %s169 = scalar_lea.vmem %s4, 2
  %v170 = vld [vmem:[%s169] sm:$0x1]
  %v172 = vperm.slane %v170, 0
  %174 = vmatpush.msra.mxu0 %v168
  %175 = vmatpush.msra.mxu0 %v167
  %176 = vmatpush.msra.mxu0 %v166
  %177 = vmatpush.msra.mxu0 %v165
  %178 = vmatpush.msra.mxu0 %v164
  %179 = vmatpush.msra.mxu0 %v163
  %180 = vmatpush.msra.mxu0 %v162
  %181 = vmatpush.msra.mxu0 %v161
  %182 = vmatpush.msra.mxu0 %v160
  %183 = vmatpush.msra.mxu0 %v159
  %184 = vmatpush.msra.mxu0 %v158
  %185 = vmatpush.msra.mxu0 %v157
  %186 = vmatpush.msra.mxu0 %v156
  %187 = vmatpush.msra.mxu0 %v155
  %188 = vmatpush.msra.mxu0 %v154
  %189 = vmatpush.msra.mxu0 %v153
  %190 = vmatmul.f32.gmra.mxu0 %v151
  %v191 = vpop.f32.mrf.mxu0
  %v192 = vadd.f32 %v172, %v191
  %193 = vdwg.mxu0
  %v194 = vtanh.pop %v192
  %v195 = vld [vmem:[%s5] sm:$0xff]
  %v196 = vld [vmem:[%s5 + $0x8] sm:$0xff]
  %v197 = vld [vmem:[%s5 + $0x10] sm:$0xff]
  %v198 = vld [vmem:[%s5 + $0x18] sm:$0xff]
  %v199 = vld [vmem:[%s5 + $0x20] sm:$0xff]
  %v200 = vld [vmem:[%s5 + $0x28] sm:$0xff]
  %v201 = vld [vmem:[%s5 + $0x30] sm:$0xff]
  %v202 = vld [vmem:[%s5 + $0x38] sm:$0xff]
  %v203 = vld [vmem:[%s5 + $0x40] sm:$0xff]
  %v204 = vld [vmem:[%s5 + $0x48] sm:$0xff]
  %v205 = vld [vmem:[%s5 + $0x50] sm:$0xff]
  %v206 = vld [vmem:[%s5 + $0x58] sm:$0xff]
  %v207 = vld [vmem:[%s5 + $0x60] sm:$0xff]
  %v208 = vld [vmem:[%s5 + $0x68] sm:$0xff]
  %v209 = vld [vmem:[%s5 + $0x70] sm:$0xff]
  %v210 = vld [vmem:[%s5 + $0x78] sm:$0xff]
  %v211 = vld [vmem:[%s6] sm:$0x1]
  %v213 = vperm.slane %v211, 0
  %215 = vmatpush.msra.mxu0 %v210
  %216 = vmatpush.msra.mxu0 %v209
  %217 = vmatpush.msra.mxu0 %v208
  %218 = vmatpush.msra.mxu0 %v207
  %219 = vmatpush.msra.mxu0 %v206
  %220 = vmatpush.msra.mxu0 %v205
  %221 = vmatpush.msra.mxu0 %v204
  %222 = vmatpush.msra.mxu0 %v203
  %223 = vmatpush.msra.mxu0 %v202
  %224 = vmatpush.msra.mxu0 %v201
  %225 = vmatpush.msra.mxu0 %v200
  %226 = vmatpush.msra.mxu0 %v199
  %227 = vmatpush.msra.mxu0 %v198
  %228 = vmatpush.msra.mxu0 %v197
  %229 = vmatpush.msra.mxu0 %v196
  %230 = vmatpush.msra.mxu0 %v195
  %231 = vmatmul.f32.gmra.mxu0 %v194
  %v232 = vpop.f32.mrf.mxu0
  %v233 = vadd.f32 %v213, %v232
  %234 = vdwg.mxu0
  %235 = vst [vmem:[%s7] sm:$0xff] %v233
  // Predicated region
  $region30: #{neural_net_forward.1} parent=0 // pred_check
    _
  $region31: #{neural_net_forward.1} parent=0 // pred_check_branch
    %237 = sbr.rel (0) target = $region33
  $region32: #{neural_net_forward.1} parent=0 // pred_region
    _
  $region33: #{neural_net_forward.1} parent=0 // pred_fallthru
    _
  // Predicated region
  $region34: #{neural_net_forward.1} parent=0 // pred_check
    _
  $region35: #{neural_net_forward.1} parent=0 // pred_check_branch
    %239 = sbr.rel (0) target = $region37
  $region36: #{neural_net_forward.1} parent=0 // pred_region
    _
  $region37: #{neural_net_forward.1} parent=0 // pred_fallthru
    _

</llo_original>
